<compile_context>
chip_gen: v5e
topology: v5e:2x2
jax: 0.10.0
libtpu: 0.0.40
codegen_flags: <defaults>
</compile_context>

<pallas_src>
import functools

import jax
import jax.numpy as jnp
from jax.experimental import pallas as pl
from jax.experimental.pallas import tpu as pltpu

_LANES = 128
_TARGET_BLOCK_BYTES = 1 << 20  # ~1 MiB per block: safe on v5e/v6e/v7x VMEM budgets


def _dropout_kernel(x_ref, o_ref, *, seed_mix, threshold, scale, tile_rows, width):
    """Inverted dropout on one (tile_rows, width) tile using a stateless hash."""
    tr, tc = x_ref.shape
    base_row = pl.program_id(0) * tile_rows  # int32 scalar

    # Global element index for this tile (row-major over the (rows, width) slab).
    row = jax.lax.broadcasted_iota(jnp.int32, (tr, tc), 0)
    col = jax.lax.broadcasted_iota(jnp.int32, (tr, tc), 1)
    gidx = (row + base_row) * width + col  # nonnegative, < 2**31

    # lowbias32 integer hash, seeded; pure function of (gidx, seed).
    h = gidx.astype(jnp.uint32) ^ jnp.uint32(seed_mix)
    h = (h ^ (h >> 16)) * jnp.uint32(0x7FEB352D)
    h = (h ^ (h >> 15)) * jnp.uint32(0x846CA68B)
    h = h ^ (h >> 16)

    # Keep with probability 1 - p: compare top-31 bits against p * 2^31.
    keep = (h >> 1) >= jnp.uint32(threshold)

    x = x_ref[...]
    scale_c = jnp.asarray(scale, dtype=x.dtype)
    o_ref[...] = jnp.where(keep, x * scale_c, jnp.zeros_like(x))


def adaptive_dropout(x, *, dropout_rate, seed=0, training=True):
    """Pallas implementation of AdaptiveDropout.forward.

    x            : any-shape array (e.g. NCHW feature map)
    dropout_rate : python float, the module's current_dropout
    seed         : int, PRNG seed for the dropout mask
    training     : if False, identity (matches `if not self.training: return x`)
    """
    if not training:
        return x

    p = float(dropout_rate)
    if p <= 0.0:
        return x
    if p >= 1.0:  # matches F.dropout(p=1): everything dropped
        return jnp.zeros_like(x)

    orig_shape = x.shape
    n = x.size
    if n == 0:
        return x
    itemsize = jnp.dtype(x.dtype).itemsize

    # Lane-dense 2D slab.  Pad only the tail (at most 127 elements) if needed.
    pad = (-n) % _LANES
    padded_n = n + pad
    width = _LANES
    for w in (1024, 512, 256, 128):
        if padded_n % w == 0:
            width = w
            break
    rows = padded_n // width

    # Block rows: as large as ~1 MiB allows, multiple of 8 (or the full extent).
    target_rows = max(8, ((_TARGET_BLOCK_BYTES // (width * itemsize)) // 8) * 8)
    tile_rows = rows if rows <= target_rows else target_rows
    num_blocks = pl.cdiv(rows, tile_rows)

    if pad:
        x2d = jnp.pad(x.reshape(-1), (0, pad)).reshape(rows, width)
    else:
        x2d = x.reshape(rows, width)

    seed_mix = (int(seed) * 0x9E3779B1 + 0x85EBCA6B) & 0xFFFFFFFF
    threshold = int(round(p * float(1 << 31)))
    scale = 1.0 / (1.0 - p)

    kernel = functools.partial(
        _dropout_kernel,
        seed_mix=seed_mix,
        threshold=threshold,
        scale=scale,
        tile_rows=tile_rows,
        width=width,
    )

    out2d = pl.pallas_call(
        kernel,
        out_shape=jax.ShapeDtypeStruct((rows, width), x.dtype),
        grid=(num_blocks,),
        in_specs=[pl.BlockSpec((tile_rows, width), lambda i: (i, 0))],
        out_specs=pl.BlockSpec((tile_rows, width), lambda i: (i, 0)),
        compiler_params=pltpu.CompilerParams(
            # Mask is a pure function of element index -> tiles are independent;
            # lets v7x shard the grid across both TensorCores.
            dimension_semantics=("parallel",),
            vmem_limit_bytes=32 * 1024 * 1024,
        ),
        cost_estimate=pl.CostEstimate(
            flops=10 * padded_n,
            transcendentals=0,
            bytes_accessed=2 * n * itemsize,
        ),
    )(x2d)

    if pad:
        return out2d.reshape(-1)[:n].reshape(orig_shape)
    return out2d.reshape(orig_shape)


# TODO(synk): AdaptiveDropout.update()/_update_* rate scheduling is host-side
# Python state (performance history, epoch schedule); it only changes the
# scalar `dropout_rate` passed here, so it has no kernel-side equivalent.


if __name__ == "__main__":
    # Module config (deterministic, from __init__ defaults)
    base_dropout = 0.1
    max_dropout = 0.3
    current_dropout = base_dropout  # rate used by forward() right after init

    key = jax.random.PRNGKey(0)
    # NCHW input, small shapes
    x = jax.random.normal(key, (2, 4, 16, 16), dtype=jnp.float32)

    # Training-mode forward (dropout applied in the Pallas kernel)
    y = adaptive_dropout(x, dropout_rate=current_dropout, seed=0, training=True)
    y = jax.block_until_ready(y)

    # Eval-mode forward (identity)
    y_eval = adaptive_dropout(x, dropout_rate=current_dropout, seed=0, training=False)
    y_eval = jax.block_until_ready(y_eval)

    # Sanity checks on dropout semantics
    assert y.shape == x.shape and y.dtype == x.dtype
    assert bool(jnp.all(y_eval == x))

    zero_frac = float(jnp.mean((y == 0.0).astype(jnp.float32)))
    # dropped fraction should be roughly p (loose tolerance for small sample)
    assert abs(zero_frac - current_dropout) < 0.05, zero_frac

    # survivors are scaled by 1/(1-p)
    scale = 1.0 / (1.0 - current_dropout)
    nz = y != 0.0
    ratio = jnp.where(nz, y / jnp.where(nz, x, 1.0), scale)
    assert bool(jnp.allclose(ratio, scale, rtol=1e-5, atol=1e-6))

    print("KERNEL_OK")
</pallas_src>

<mosaic_0001>
module attributes {stable_mosaic.version = 11 : i64} {
  func.func @_dropout_kernel(%arg0: i32, %arg1: memref<2x1024xf32, #tpu.memory_space<vmem>>, %arg2: memref<2x1024xf32, #tpu.memory_space<vmem>>) attributes {dimension_semantics = [#tpu.dimension_semantics<parallel>], iteration_bounds = array<i64: 1>, scalar_prefetch = 0 : i64, scratch_operands = 0 : i64, tpu.core_type = #tpu.core_type<tc>, window_params = [{transform_indices = @transform_0, window_bounds = array<i64: 2, 1024>}, {transform_indices = @transform_1, window_bounds = array<i64: 2, 1024>}]} {
    %c2_i32 = arith.constant 2 : i32
    %0 = arith.muli %arg0, %c2_i32 : i32
    %1 = tpu.iota {dimensions = array<i32: 0>} : vector<2x1024xi32>
    %2 = tpu.iota {dimensions = array<i32: 1>} : vector<2x1024xi32>
    %3 = vector.broadcast %0 : i32 to vector<2x1024xi32>
    %4 = arith.addi %1, %3 : vector<2x1024xi32>
    %c1024_i32 = arith.constant 1024 : i32
    %5 = vector.broadcast %c1024_i32 : i32 to vector<2x1024xi32>
    %6 = arith.muli %4, %5 : vector<2x1024xi32>
    %7 = arith.addi %6, %2 : vector<2x1024xi32>
    %c-2048144789_i32 = arith.constant -2048144789 : i32
    %8 = vector.broadcast %c-2048144789_i32 : i32 to vector<2x1024xi32>
    %9 = arith.xori %7, %8 : vector<2x1024xi32>
    %c16_i32 = arith.constant 16 : i32
    %10 = vector.broadcast %c16_i32 : i32 to vector<2x1024xi32>
    %11 = arith.shrui %9, %10 : vector<2x1024xi32>
    %12 = arith.xori %9, %11 : vector<2x1024xi32>
    %c2146121005_i32 = arith.constant 2146121005 : i32
    %13 = vector.broadcast %c2146121005_i32 : i32 to vector<2x1024xi32>
    %14 = arith.muli %12, %13 : vector<2x1024xi32>
    %c15_i32 = arith.constant 15 : i32
    %15 = vector.broadcast %c15_i32 : i32 to vector<2x1024xi32>
    %16 = arith.shrui %14, %15 : vector<2x1024xi32>
    %17 = arith.xori %14, %16 : vector<2x1024xi32>
    %c-2073254261_i32 = arith.constant -2073254261 : i32
    %18 = vector.broadcast %c-2073254261_i32 : i32 to vector<2x1024xi32>
    %19 = arith.muli %17, %18 : vector<2x1024xi32>
    %c16_i32_0 = arith.constant 16 : i32
    %20 = vector.broadcast %c16_i32_0 : i32 to vector<2x1024xi32>
    %21 = arith.shrui %19, %20 : vector<2x1024xi32>
    %22 = arith.xori %19, %21 : vector<2x1024xi32>
    %c1_i32 = arith.constant 1 : i32
    %23 = vector.broadcast %c1_i32 : i32 to vector<2x1024xi32>
    %24 = arith.shrui %22, %23 : vector<2x1024xi32>
    %c214748365_i32 = arith.constant 214748365 : i32
    %25 = vector.broadcast %c214748365_i32 : i32 to vector<2x1024xi32>
    %26 = arith.cmpi uge, %24, %25 : vector<2x1024xi32>
    %c0 = arith.constant 0 : index
    %c0_1 = arith.constant 0 : index
    %27 = vector.load %arg1[%c0, %c0_1] : memref<2x1024xf32, #tpu.memory_space<vmem>>, vector<2x1024xf32>
    %cst = arith.constant 1.11111116 : f32
    %28 = vector.broadcast %cst : f32 to vector<2x1024xf32>
    %29 = arith.mulf %27, %28 : vector<2x1024xf32>
    %cst_2 = arith.constant 0.000000e+00 : f32
    %30 = vector.broadcast %cst_2 : f32 to vector<2x1024xf32>
    %31 = arith.select %26, %29, %30 : vector<2x1024xi1>, vector<2x1024xf32>
    %c0_3 = arith.constant 0 : index
    %c0_4 = arith.constant 0 : index
    %32 = vector.load %arg2[%c0_3, %c0_4] : memref<2x1024xf32, #tpu.memory_space<vmem>>, vector<2x1024xf32>
    tpu.vector_store %arg2[%c0_3, %c0_4], %31 {strides = array<i32>} : memref<2x1024xf32, #tpu.memory_space<vmem>>, vector<2x1024xf32>,
    return
  }
  func.func @transform_0(%arg0: i32) -> (i32, i32) {
    %c0_i32 = arith.constant 0 : i32
    %c0_i32_0 = arith.constant 0 : i32
    return %arg0, %c0_i32 : i32, i32
  }
  func.func @transform_1(%arg0: i32) -> (i32, i32) {
    %c0_i32 = arith.constant 0 : i32
    %c0_i32_0 = arith.constant 0 : i32
    return %arg0, %c0_i32 : i32, i32
  }
}

</mosaic_0001>

<llo_original>
// kernel: tpu_custom_call.1
$region0: #{tpu_custom_call.1}
  #allocation0 [shape = 'u32[]', space=smem, size = 0x4, offset = 0x4, fixed_abs, tag = 'smem constant byte address 0x4 - core index']
  #allocation1 [shape = 'u32[72,128]{1,0:T(1,128)}', space=vmem, size = 0x9000, scoped, tag = 'internal scratch']
  %s0 = inlined_call_operand.hbm [shape: f32[2,1024], index: 0, kind: input, shape index: {}]
  %s1 = inlined_call_operand.hbm [shape: f32[2,1024], index: 1, kind: output, shape index: {}]
  %s2 = sld [smem:[#allocation0]]
  $region18: #{tpu_custom_call.1} parent=0
    _
  %s4 = ssub.s32 1, %s2
  %s5 = scalar_select 0, %s4, %s2
  $region1: #{tpu_custom_call.1} parent=0
    #allocation2 [shape = 'u8[8192]{0}', space=vmem, size = 0x2000, scoped, tag = 'input window, operand 0, single buffered']
    #allocation3 [shape = 's32[1]{0}', space=sflag, size = 0x4, scoped, tag = 'scoped memory for tpu_custom_call.1']
    #allocation4 [shape = 's32[1]{0}', space=sflag, size = 0x4, scoped, tag = 'scoped memory for tpu_custom_call.1']
    #allocation5 [shape = 'u8[8192]{0}', space=vmem, size = 0x2000, scoped, tag = 'output window, operand 0, single buffered']
    %6 = vsyncpa [#allocation3], 0
    %7 = vsyncpa [#allocation4], 0
    // Predicated region
    $region2: #{tpu_custom_call.1} parent=1 // pred_check
      _
    $region3: #{tpu_custom_call.1} parent=1 // pred_check_branch
      %9 = sbr.rel (0) target = $region5
    $region4: #{tpu_custom_call.1} parent=1 // pred_region
      %11 = vsyncadd [#allocation3], 0
      %s13 = sshll.u32 %s0, 4
      %s14 = int_to_ptr.hbm [resolvable:$true] %s13
      %s15 = sshll.u32 [#allocation2], 4
      %s16 = int_to_ptr.vmem [resolvable:$true] %s15
      %18 = dma.hbm_to_vmem [thread:$0]  %s14, 256, %s16, [#allocation3]
    $region5: #{tpu_custom_call.1} parent=1 // pred_fallthru
      _
    // Predicated region
    $region6: #{tpu_custom_call.1} parent=1 // pred_check
      _
    $region7: #{tpu_custom_call.1} parent=1 // pred_check_branch
      %20 = sbr.rel (0) target = $region9
    $region8: #{tpu_custom_call.1} parent=1 // pred_region
      %22 = dma.done [#allocation3], 256
    $region9: #{tpu_custom_call.1} parent=1 // pred_fallthru
      _
    %s23 = smul.u32 0, 2
    %v24 = vlaneseq
    %v25 = vshrl.u32 %v24, 7
    %v26 = vlaneseq
    %v27 = vand.u32 %v26, 127
    %v28 = vadd.s32 %v27, 128
    %v29 = vadd.s32 %v27, 256
    %v30 = vadd.s32 %v27, 384
    %v31 = vadd.s32 %v27, 512
    %v32 = vadd.s32 %v27, 640
    %v33 = vadd.s32 %v27, 768
    %v34 = vadd.s32 %v27, 896
    %v35 = vstv %s23
    %v36 = vadd.s32 %v25, %v35
    %v37 = vmul.u32 %v36, 1024
    %v38 = vadd.s32 %v37, %v27
    %v39 = vadd.s32 %v37, %v28
    %v40 = vadd.s32 %v37, %v29
    %v41 = vadd.s32 %v37, %v30
    %v42 = vadd.s32 %v37, %v31
    %v43 = vadd.s32 %v37, %v32
    %v44 = vadd.s32 %v37, %v33
    %v45 = vadd.s32 %v37, %v34
    %v46 = vxor.u32 %v38, 2246822507
    %v47 = vxor.u32 %v39, 2246822507
    %v48 = vxor.u32 %v40, 2246822507
    %v49 = vxor.u32 %v41, 2246822507
    %v50 = vxor.u32 %v42, 2246822507
    %v51 = vxor.u32 %v43, 2246822507
    %v52 = vxor.u32 %v44, 2246822507
    %v53 = vxor.u32 %v45, 2246822507
    %v54 = vshrl.u32 %v46, 16
    %v55 = vshrl.u32 %v47, 16
    %v56 = vshrl.u32 %v48, 16
    %v57 = vshrl.u32 %v49, 16
    %v58 = vshrl.u32 %v50, 16
    %v59 = vshrl.u32 %v51, 16
    %v60 = vshrl.u32 %v52, 16
    %v61 = vshrl.u32 %v53, 16
    %v62 = vxor.u32 %v46, %v54
    %v63 = vxor.u32 %v47, %v55
    %v64 = vxor.u32 %v48, %v56
    %v65 = vxor.u32 %v49, %v57
    %v66 = vxor.u32 %v50, %v58
    %v67 = vxor.u32 %v51, %v59
    %v68 = vxor.u32 %v52, %v60
    %v69 = vxor.u32 %v53, %v61
    %v70 = vmul.u32 %v62, 2146121005
    %v71 = vmul.u32 %v63, 2146121005
    %v72 = vmul.u32 %v64, 2146121005
    %v73 = vmul.u32 %v65, 2146121005
    %v74 = vmul.u32 %v66, 2146121005
    %v75 = vmul.u32 %v67, 2146121005
    %v76 = vmul.u32 %v68, 2146121005
    %v77 = vmul.u32 %v69, 2146121005
    %v78 = vshrl.u32 %v70, 15
    %v79 = vshrl.u32 %v71, 15
    %v80 = vshrl.u32 %v72, 15
    %v81 = vshrl.u32 %v73, 15
    %v82 = vshrl.u32 %v74, 15
    %v83 = vshrl.u32 %v75, 15
    %v84 = vshrl.u32 %v76, 15
    %v85 = vshrl.u32 %v77, 15
    %v86 = vxor.u32 %v70, %v78
    %v87 = vxor.u32 %v71, %v79
    %v88 = vxor.u32 %v72, %v80
    %v89 = vxor.u32 %v73, %v81
    %v90 = vxor.u32 %v74, %v82
    %v91 = vxor.u32 %v75, %v83
    %v92 = vxor.u32 %v76, %v84
    %v93 = vxor.u32 %v77, %v85
    %v94 = vmul.u32 %v86, 2221713035
    %v95 = vmul.u32 %v87, 2221713035
    %v96 = vmul.u32 %v88, 2221713035
    %v97 = vmul.u32 %v89, 2221713035
    %v98 = vmul.u32 %v90, 2221713035
    %v99 = vmul.u32 %v91, 2221713035
    %v100 = vmul.u32 %v92, 2221713035
    %v101 = vmul.u32 %v93, 2221713035
    %v102 = vshrl.u32 %v94, 16
    %v103 = vshrl.u32 %v95, 16
    %v104 = vshrl.u32 %v96, 16
    %v105 = vshrl.u32 %v97, 16
    %v106 = vshrl.u32 %v98, 16
    %v107 = vshrl.u32 %v99, 16
    %v108 = vshrl.u32 %v100, 16
    %v109 = vshrl.u32 %v101, 16
    %v110 = vxor.u32 %v94, %v102
    %v111 = vxor.u32 %v95, %v103
    %v112 = vxor.u32 %v96, %v104
    %v113 = vxor.u32 %v97, %v105
    %v114 = vxor.u32 %v98, %v106
    %v115 = vxor.u32 %v99, %v107
    %v116 = vxor.u32 %v100, %v108
    %v117 = vxor.u32 %v101, %v109
    %v118 = vshrl.u32 %v110, 1
    %v119 = vshrl.u32 %v111, 1
    %v120 = vshrl.u32 %v112, 1
    %v121 = vshrl.u32 %v113, 1
    %v122 = vshrl.u32 %v114, 1
    %v123 = vshrl.u32 %v115, 1
    %v124 = vshrl.u32 %v116, 1
    %v125 = vshrl.u32 %v117, 1
    %v126 = vadd.s32 %v118, 2147483648
    %vm128 = vcmp.ge.s32.totalorder %v126, 2362232013
    %v129 = vadd.s32 %v119, 2147483648
    %vm131 = vcmp.ge.s32.totalorder %v129, 2362232013
    %v132 = vadd.s32 %v120, 2147483648
    %vm134 = vcmp.ge.s32.totalorder %v132, 2362232013
    %v135 = vadd.s32 %v121, 2147483648
    %vm137 = vcmp.ge.s32.totalorder %v135, 2362232013
    %v138 = vadd.s32 %v122, 2147483648
    %vm140 = vcmp.ge.s32.totalorder %v138, 2362232013
    %v141 = vadd.s32 %v123, 2147483648
    %vm143 = vcmp.ge.s32.totalorder %v141, 2362232013
    %v144 = vadd.s32 %v124, 2147483648
    %vm146 = vcmp.ge.s32.totalorder %v144, 2362232013
    %v147 = vadd.s32 %v125, 2147483648
    %vm149 = vcmp.ge.s32.totalorder %v147, 2362232013
    %v150 = vld [vmem:[#allocation2] sm:$0xff]
    %v151 = vld [vmem:[#allocation2 + $0x8] sm:$0xff]
    %v152 = vmul.f32 %v150, 1.1111112
    %v153 = vmul.f32 %v151, 1.1111112
    %156 = vst [vmem:[#allocation1] ss:$4 sm:$0xff] %v152
    %s157 = scalar_lea.vmem [#allocation1], 32
    %158 = vst [vmem:[%s157] ss:$4 sm:$0xff] %v153
    %v159 = vld.sshfl [vmem:[#allocation1] sm:$0xff pattern:$0x73625140]
    %v160 = vld.sshfl [vmem:[#allocation1 + $0x8] sm:$0xff pattern:$0x73625140]
    %v161 = vld.sshfl [vmem:[#allocation1 + $0x10] sm:$0xff pattern:$0x73625140]
    %v162 = vld.sshfl [vmem:[#allocation1 + $0x18] sm:$0xff pattern:$0x73625140]
    %v163 = vld.sshfl [vmem:[#allocation1 + $0x20] sm:$0xff pattern:$0x73625140]
    %v164 = vld.sshfl [vmem:[#allocation1 + $0x28] sm:$0xff pattern:$0x73625140]
    %v165 = vld.sshfl [vmem:[#allocation1 + $0x30] sm:$0xff pattern:$0x73625140]
    %v166 = vld.sshfl [vmem:[#allocation1 + $0x38] sm:$0xff pattern:$0x73625140]
    %v175 = vsel %vm128, %v159, 0.0
    %v176 = vsel %vm131, %v160, 0.0
    %v177 = vsel %vm134, %v161, 0.0
    %v178 = vsel %vm137, %v162, 0.0
    %v179 = vsel %vm140, %v163, 0.0
    %v180 = vsel %vm143, %v164, 0.0
    %v181 = vsel %vm146, %v165, 0.0
    %v182 = vsel %vm149, %v166, 0.0
    %v191 = vrot.slane %v176, 6
    %v192 = vrot.slane %v177, 4
    %v193 = vrot.slane %v178, 2
    %v194 = vrot.slane %v180, 6
    %v195 = vrot.slane %v181, 4
    %v196 = vrot.slane %v182, 2
    %vm197 = vcmask 1041408
    %v198 = vsel %vm197, %v175, %v191
    %vm199 = vcmask 1045508
    %v200 = vsel %vm199, %v192, %v193
    %vm201 = vcmask 1043456
    %v202 = vsel %vm201, %v198, %v200
    %v203 = vsel %vm197, %v179, %v194
    %v204 = vsel %vm199, %v195, %v196
    %v205 = vsel %vm201, %v203, %v204
    %208 = vst [vmem:[#allocation5] sm:$0xff] %v202
    %209 = vst [vmem:[#allocation5 + $0x8] sm:$0xff] %v205
    // Predicated region
    $region10: #{tpu_custom_call.1} parent=1 // pred_check
      _
    $region11: #{tpu_custom_call.1} parent=1 // pred_check_branch
      %211 = sbr.rel (0) target = $region13
    $region12: #{tpu_custom_call.1} parent=1 // pred_region
      %213 = vsyncadd [#allocation4], 0
      %s215 = sshll.u32 [#allocation5], 4
      %s216 = int_to_ptr.vmem [resolvable:$true] %s215
      %s217 = sshll.u32 %s1, 4
      %s218 = int_to_ptr.hbm [resolvable:$true] %s217
      %220 = dma.vmem_to_hbm [thread:$0]  %s216, 256, %s218, [#allocation4]
    $region13: #{tpu_custom_call.1} parent=1 // pred_fallthru
      _
    // Predicated region
    $region14: #{tpu_custom_call.1} parent=1 // pred_check
      _
    $region15: #{tpu_custom_call.1} parent=1 // pred_check_branch
      %222 = sbr.rel (0) target = $region17
    $region16: #{tpu_custom_call.1} parent=1 // pred_region
      %224 = dma.done [#allocation4], 256
    $region17: #{tpu_custom_call.1} parent=1 // pred_fallthru
      _
    %225 = vsyncpa [#allocation3], 1
    %226 = vsyncpa [#allocation4], 1

</llo_original>
